<compile_context>
chip_gen: v7x
topology: tpu7x:2x2x1
jax: 0.10.0
libtpu: 0.0.40
codegen_flags: <defaults>
</compile_context>

<pallas_src>
import jax
import jax.numpy as jnp
from jax import lax
from jax.experimental import pallas as pl
from jax.experimental.pallas import tpu as pltpu


def _pooler_kernel(x_ref, w_ref, b_ref, o_ref):
    # x_ref: (TB, H) first-token activations for this batch tile
    # w_ref: (H, H)  nn.Linear weight, (out_features, in_features) layout
    # b_ref: (1, H)  bias
    # o_ref: (TB, H) pooled output tile
    x = x_ref[...]
    # y = x @ W^T : contract x's feature dim with W's in_features dim on the
    # MXU, accumulating in f32 (no transposed copy of W needed).
    y = lax.dot_general(
        x,
        w_ref[...],
        dimension_numbers=(((1,), (1,)), ((), ())),
        preferred_element_type=jnp.float32,
    )
    y = y + b_ref[...].astype(jnp.float32)
    o_ref[...] = jnp.tanh(y).astype(o_ref.dtype)


def bert_pooler(hidden_states, weight, bias, pool=True, block_b=512):
    """BertPooler forward.

    hidden_states: (B, S, H)  (or (B, H) if pool=False)
    weight:        (H, H) PyTorch nn.Linear layout (out_features, in_features)
    bias:          (H,)
    """
    if pool:
        B, S, H = hidden_states.shape
        if H % 128 == 0 or S == 1:
            # Fold the pooling into the BlockSpec: view (B, S, H) as (B, S*H)
            # (free reshape of a contiguous array) and let the kernel's DMA
            # fetch only columns [0, H) of each row, i.e. token 0.
            x2d = hidden_states.reshape(B, S * H)
        else:
            # Lane dim not 128-aligned: keep a plain wrapper slice so every
            # block stays (8,128)-legal (pad H to a multiple of 128 upstream
            # if this path ever matters for performance).
            x2d = hidden_states[:, 0]
    else:
        B, H = hidden_states.shape
        x2d = hidden_states

    # Batch tile: biggest tile up to `block_b` rows. If B fits in one tile we
    # use the full dim (always a legal block); otherwise block_b is a multiple
    # of 8 sublanes and Pallas masks the partial trailing block.
    tb = B if B <= block_b else block_b
    grid = (pl.cdiv(B, tb),)

    itemsize = hidden_states.dtype.itemsize
    # VMEM budget: resident weight + double-buffered x/out tiles + bias,
    # plus headroom; clamped to 64 MiB so it also fits one v7x TensorCore.
    est_vmem = (
        H * H * itemsize            # weight (resident across grid steps)
        + 2 * tb * H * itemsize     # x tile, double-buffered
        + 2 * tb * H * itemsize     # out tile, double-buffered
        + 8 * H * itemsize          # bias (sublane-padded)
        + (8 << 20)                 # headroom / compiler scratch
    )
    vmem_limit = int(min(64 << 20, max(32 << 20, est_vmem)))

    out = pl.pallas_call(
        _pooler_kernel,
        out_shape=jax.ShapeDtypeStruct((B, H), hidden_states.dtype),
        grid_spec=pltpu.PrefetchScalarGridSpec(
            num_scalar_prefetch=0,
            grid=grid,
            in_specs=[
                # First-token activations: batch-tiled rows, column block 0.
                pl.BlockSpec((tb, H), lambda i: (i, 0)),
                # Weight / bias: constant index_map -> stay VMEM-resident.
                pl.BlockSpec((H, H), lambda i: (0, 0)),
                pl.BlockSpec((1, H), lambda i: (0, 0)),
            ],
            out_specs=pl.BlockSpec((tb, H), lambda i: (i, 0)),
        ),
        compiler_params=pltpu.CompilerParams(
            dimension_semantics=("parallel",),
            vmem_limit_bytes=vmem_limit,
        ),
        cost_estimate=pl.CostEstimate(
            flops=2 * B * H * H,
            transcendentals=B * H,
            bytes_accessed=H * H * itemsize + 2 * B * H * itemsize + H * itemsize,
        ),
    )(x2d, weight, bias.reshape(1, H))
    return out


if __name__ == "__main__":
    # Small deterministic setup consistent with BertPooler.
    # H = 128 keeps the lane dim 128-aligned (like real BERT's 768/1024).
    B, S, H = 2, 8, 128
    key = jax.random.PRNGKey(0)
    k_x, k_w, k_b = jax.random.split(key, 3)

    hidden_states = jax.random.normal(k_x, (B, S, H), dtype=jnp.float32)
    # nn.Linear(hidden, hidden): weight (out, in), bias (out,)
    weight = jax.random.normal(k_w, (H, H), dtype=jnp.float32) * 0.02
    bias = jax.random.normal(k_b, (H,), dtype=jnp.float32) * 0.02

    pooled = bert_pooler(hidden_states, weight, bias, pool=True)
    pooled = jax.block_until_ready(pooled)

    # Pure-JAX reference check
    ref = jnp.tanh(hidden_states[:, 0] @ weight.T + bias)
    assert pooled.shape == (B, H)
    assert jnp.allclose(pooled, ref, atol=1e-5, rtol=1e-5)

    # Also exercise the pool=False path (input already (B, H)).
    pooled_np = jax.block_until_ready(
        bert_pooler(hidden_states[:, 0], weight, bias, pool=False)
    )
    assert jnp.allclose(pooled_np, ref, atol=1e-5, rtol=1e-5)

    print("KERNEL_OK")
</pallas_src>

<mosaic_0001>
module attributes {stable_mosaic.version = 11 : i64} {
  func.func @_pooler_kernel(%arg0: i32, %arg1: memref<2x128xf32, #tpu.memory_space<vmem>>, %arg2: memref<128x128xf32, #tpu.memory_space<vmem>>, %arg3: memref<1x128xf32, #tpu.memory_space<vmem>>, %arg4: memref<2x128xf32, #tpu.memory_space<vmem>>) attributes {dimension_semantics = [#tpu.dimension_semantics<parallel>], iteration_bounds = array<i64: 1>, scalar_prefetch = 0 : i64, scratch_operands = 0 : i64, tpu.core_type = #tpu.core_type<tc>, window_params = [{transform_indices = @transform_0, window_bounds = array<i64: 2, 128>}, {pipeline_mode = #tpu.pipeline_mode<synchronous>, transform_indices = @transform_1, window_bounds = array<i64: 128, 128>}, {pipeline_mode = #tpu.pipeline_mode<synchronous>, transform_indices = @transform_2, window_bounds = array<i64: 1, 128>}, {transform_indices = @transform_3, window_bounds = array<i64: 2, 128>}]} {
    %c0 = arith.constant 0 : index
    %c0_0 = arith.constant 0 : index
    %0 = vector.load %arg1[%c0, %c0_0] : memref<2x128xf32, #tpu.memory_space<vmem>>, vector<2x128xf32>
    %c0_1 = arith.constant 0 : index
    %c0_2 = arith.constant 0 : index
    %1 = vector.load %arg2[%c0_1, %c0_2] : memref<128x128xf32, #tpu.memory_space<vmem>>, vector<128x128xf32>
    %cst = arith.constant dense<0.000000e+00> : vector<2x128xf32>
    %2 = tpu.matmul %0, %1, %cst {dimension_numbers = #tpu.dot_dimension_numbers<[1], [1], [0], [0], [0, 0, 1, 0], [], []>} : vector<2x128xf32>, vector<128x128xf32>, vector<2x128xf32> -> vector<2x128xf32>
    %c0_3 = arith.constant 0 : index
    %c0_4 = arith.constant 0 : index
    %3 = vector.load %arg3[%c0_3, %c0_4] : memref<1x128xf32, #tpu.memory_space<vmem>>, vector<1x128xf32>
    %4 = vector.broadcast %3 : vector<1x128xf32> to vector<2x128xf32>
    %5 = arith.addf %2, %4 : vector<2x128xf32>
    %6 = math.tanh %5 : vector<2x128xf32>
    %c0_5 = arith.constant 0 : index
    %c0_6 = arith.constant 0 : index
    %7 = vector.load %arg4[%c0_5, %c0_6] : memref<2x128xf32, #tpu.memory_space<vmem>>, vector<2x128xf32>
    tpu.vector_store %arg4[%c0_5, %c0_6], %6 {strides = array<i32>} : memref<2x128xf32, #tpu.memory_space<vmem>>, vector<2x128xf32>,
    return
  }
  func.func @transform_0(%arg0: i32) -> (i32, i32) {
    %c0_i32 = arith.constant 0 : i32
    %c0_i32_0 = arith.constant 0 : i32
    return %arg0, %c0_i32 : i32, i32
  }
  func.func @transform_1(%arg0: i32) -> (i32, i32) {
    %c0_i32 = arith.constant 0 : i32
    %c0_i32_0 = arith.constant 0 : i32
    %c0_i32_1 = arith.constant 0 : i32
    return %c0_i32, %c0_i32_0 : i32, i32
  }
  func.func @transform_2(%arg0: i32) -> (i32, i32) {
    %c0_i32 = arith.constant 0 : i32
    %c0_i32_0 = arith.constant 0 : i32
    %c0_i32_1 = arith.constant 0 : i32
    return %c0_i32, %c0_i32_0 : i32, i32
  }
  func.func @transform_3(%arg0: i32) -> (i32, i32) {
    %c0_i32 = arith.constant 0 : i32
    %c0_i32_0 = arith.constant 0 : i32
    return %arg0, %c0_i32 : i32, i32
  }
}

</mosaic_0001>

<llo_original>
// kernel: tpu_custom_call.1
$region0: #{tpu_custom_call.1}
  #allocation0 [shape = 'u32[]', space=smem, size = 0x4, offset = 0x4, fixed_abs, tag = 'smem constant byte address 0x4 - core index']
  #allocation1 [shape = 'u32[144,128]{1,0:T(1,128)}', space=vmem, size = 0x12000, scoped, tag = 'internal scratch']
  %s0 = inlined_call_operand.hbm [shape: f32[2,1024], index: 0, kind: input, shape index: {}]
  %s1 = inlined_call_operand.hbm [shape: f32[128,128], index: 1, kind: input, shape index: {}]
  %s2 = inlined_call_operand.vmem [shape: f32[1,128], index: 2, kind: input, shape index: {}]
  %s3 = inlined_call_operand.hbm [shape: f32[2,128], index: 3, kind: output, shape index: {}]
  %s4 = sld [smem:[#allocation0]]
  $region30: #{tpu_custom_call.1} parent=0
    _
  %s6 = ssub.s32 1, %s4
  %s7 = scalar_select 0, %s6, %s4
  $region1: #{tpu_custom_call.1} parent=0
    #allocation2 [shape = 'u8[1024]{0}', space=vmem, size = 0x400, scoped, tag = 'input window, operand 0, single buffered']
    #allocation3 [shape = 's32[1]{0}', space=sflag, size = 0x4, scoped, tag = 'scoped memory for tpu_custom_call.1']
    #allocation4 [shape = 's32[1]{0}', space=sflag, size = 0x4, scoped, tag = 'scoped memory for tpu_custom_call.1']
    #allocation5 [shape = 'u8[65536]{0}', space=vmem, size = 0x10000, scoped, tag = 'input window, operand 1, single buffered']
    #allocation6 [shape = 's32[1]{0}', space=sflag, size = 0x4, scoped, tag = 'scoped memory for tpu_custom_call.1']
    #allocation7 [shape = 'u8[1024]{0}', space=vmem, size = 0x400, scoped, tag = 'output window, operand 0, single buffered']
    %8 = vsyncpa [#allocation3], 0
    %9 = vsyncpa [#allocation6], 0
    %10 = vsyncpa [#allocation4], 0
    // Predicated region
    $region2: #{tpu_custom_call.1} parent=1 // pred_check
      _
    $region3: #{tpu_custom_call.1} parent=1 // pred_check_branch
      %12 = sbr.rel (0) target = $region5
    $region4: #{tpu_custom_call.1} parent=1 // pred_region
      %s14 = ssub.s32 32, 32
      %15 = vsyncadd [#allocation3], %s14
      %s17 = sshll.u32 [#allocation2], 4
      %s18 = int_to_ptr.vmem [resolvable:$true] %s17
      %20 = dma.hbm_to_vmem [thread:$0]  %s0, 32, %s18, [#allocation3]
    $region5: #{tpu_custom_call.1} parent=1 // pred_fallthru
      _
    // Predicated region
    $region6: #{tpu_custom_call.1} parent=1 // pred_check
      _
    $region7: #{tpu_custom_call.1} parent=1 // pred_check_branch
      %22 = sbr.rel (0) target = $region9
    $region8: #{tpu_custom_call.1} parent=1 // pred_region
      %s24 = ssub.s32 2048, 2048
      %25 = vsyncadd [#allocation6], %s24
      %s26 = sshll.u32 [#allocation5], 4
      %s27 = int_to_ptr.vmem [resolvable:$true] %s26
      %32 = dma.hbm_to_vmem [thread:$0]  %s1, 2048, %s27, [#allocation6], 128, 128, 8
    $region9: #{tpu_custom_call.1} parent=1 // pred_fallthru
      _
    // Predicated region
    $region10: #{tpu_custom_call.1} parent=1 // pred_check
      _
    $region11: #{tpu_custom_call.1} parent=1 // pred_check_branch
      %34 = sbr.rel (0) target = $region13
    $region12: #{tpu_custom_call.1} parent=1 // pred_region
      _
    $region13: #{tpu_custom_call.1} parent=1 // pred_fallthru
      _
    // Predicated region
    $region14: #{tpu_custom_call.1} parent=1 // pred_check
      _
    $region15: #{tpu_custom_call.1} parent=1 // pred_check_branch
      %36 = sbr.rel (0) target = $region17
    $region16: #{tpu_custom_call.1} parent=1 // pred_region
      %37 = dma.done [#allocation3], 32
    $region17: #{tpu_custom_call.1} parent=1 // pred_fallthru
      _
    // Predicated region
    $region18: #{tpu_custom_call.1} parent=1 // pred_check
      _
    $region19: #{tpu_custom_call.1} parent=1 // pred_check_branch
      %39 = sbr.rel (0) target = $region21
    $region20: #{tpu_custom_call.1} parent=1 // pred_region
      %40 = dma.done [#allocation6], 2048
    $region21: #{tpu_custom_call.1} parent=1 // pred_fallthru
      _
    %v41 = vld [vmem:[#allocation2] sm:$0x3]
    %v42 = vld [vmem:[#allocation5] sm:$0xff]
    %v43 = vld [vmem:[#allocation5 + $0x8] sm:$0xff]
    %v44 = vld [vmem:[#allocation5 + $0x10] sm:$0xff]
    %v45 = vld [vmem:[#allocation5 + $0x18] sm:$0xff]
    %v46 = vld [vmem:[#allocation5 + $0x20] sm:$0xff]
    %v47 = vld [vmem:[#allocation5 + $0x28] sm:$0xff]
    %v48 = vld [vmem:[#allocation5 + $0x30] sm:$0xff]
    %v49 = vld [vmem:[#allocation5 + $0x38] sm:$0xff]
    %v50 = vld [vmem:[#allocation5 + $0x40] sm:$0xff]
    %v51 = vld [vmem:[#allocation5 + $0x48] sm:$0xff]
    %v52 = vld [vmem:[#allocation5 + $0x50] sm:$0xff]
    %v53 = vld [vmem:[#allocation5 + $0x58] sm:$0xff]
    %v54 = vld [vmem:[#allocation5 + $0x60] sm:$0xff]
    %v55 = vld [vmem:[#allocation5 + $0x68] sm:$0xff]
    %v56 = vld [vmem:[#allocation5 + $0x70] sm:$0xff]
    %v57 = vld [vmem:[#allocation5 + $0x78] sm:$0xff]
    %v58 = vld [vmem:[%s2] sm:$0x1]
    %v60 = vlaneseq
    %v61 = vshrl.u32 %v60, 7
    %v62 = vsub.s32 0, %v61
    %v63 = vrot.slane %v58, %v62
    %65 = vmatprep.subr.mxu0 0.0
    %66 = vmatpush1.xpose.msra.mxu0 %v42
    %67 = vmatprep.subr.mxu0 0.0
    %68 = vmatpush1.xpose.msra.mxu0 %v43
    %69 = vmatprep.subr.mxu0 0.0
    %70 = vmatpush1.xpose.msra.mxu0 %v44
    %71 = vmatprep.subr.mxu0 0.0
    %72 = vmatpush1.xpose.msra.mxu0 %v45
    %73 = vmatprep.subr.mxu0 0.0
    %74 = vmatpush1.xpose.msra.mxu0 %v46
    %75 = vmatprep.subr.mxu0 0.0
    %76 = vmatpush1.xpose.msra.mxu0 %v47
    %77 = vmatprep.subr.mxu0 0.0
    %78 = vmatpush1.xpose.msra.mxu0 %v48
    %79 = vmatprep.subr.mxu0 0.0
    %80 = vmatpush1.xpose.msra.mxu0 %v49
    %81 = vmatprep.subr.mxu0 0.0
    %82 = vmatpush1.xpose.msra.mxu0 %v50
    %83 = vmatprep.subr.mxu0 0.0
    %84 = vmatpush1.xpose.msra.mxu0 %v51
    %85 = vmatprep.subr.mxu0 0.0
    %86 = vmatpush1.xpose.msra.mxu0 %v52
    %87 = vmatprep.subr.mxu0 0.0
    %88 = vmatpush1.xpose.msra.mxu0 %v53
    %89 = vmatprep.subr.mxu0 0.0
    %90 = vmatpush1.xpose.msra.mxu0 %v54
    %91 = vmatprep.subr.mxu0 0.0
    %92 = vmatpush1.xpose.msra.mxu0 %v55
    %93 = vmatprep.subr.mxu0 0.0
    %94 = vmatpush1.xpose.msra.mxu0 %v56
    %95 = vmatprep.subr.mxu0 0.0
    %96 = vmatpush1.xpose.msra.mxu0 %v57
    %97 = vmatprep.subr.mxu0 0.0
    %98 = vmatpush1.xpose.msra.mxu0 0.0
    %99 = vmatprep.subr.mxu0 0.0
    %100 = vmatpush1.xpose.msra.mxu0 0.0
    %101 = vmatprep.subr.mxu0 0.0
    %102 = vmatpush1.xpose.msra.mxu0 0.0
    %103 = vmatprep.subr.mxu0 0.0
    %104 = vmatpush1.xpose.msra.mxu0 0.0
    %105 = vmatprep.subr.mxu0 0.0
    %106 = vmatpush1.xpose.msra.mxu0 0.0
    %107 = vmatprep.subr.mxu0 0.0
    %108 = vmatpush1.xpose.msra.mxu0 0.0
    %109 = vmatprep.subr.mxu0 0.0
    %110 = vmatpush1.xpose.msra.mxu0 0.0
    %111 = vmatprep.subr.mxu0 0.0
    %112 = vmatpush1.xpose.msra.mxu0 0.0
    %113 = vmatprep.subr.mxu0 0.0
    %114 = vmatpush1.xpose.msra.mxu0 0.0
    %115 = vmatprep.subr.mxu0 0.0
    %116 = vmatpush1.xpose.msra.mxu0 0.0
    %117 = vmatprep.subr.mxu0 0.0
    %118 = vmatpush1.xpose.msra.mxu0 0.0
    %119 = vmatprep.subr.mxu0 0.0
    %120 = vmatpush1.xpose.msra.mxu0 0.0
    %121 = vmatprep.subr.mxu0 0.0
    %122 = vmatpush1.xpose.msra.mxu0 0.0
    %123 = vmatprep.subr.mxu0 0.0
    %124 = vmatpush1.xpose.msra.mxu0 0.0
    %125 = vmatprep.subr.mxu0 0.0
    %126 = vmatpush1.xpose.msra.mxu0 0.0
    %127 = vmatprep.subr.mxu0 0.0
    %128 = vmatpush1.xpose.msra.mxu0 0.0
    %129 = vmatprep.mubr.f32.mxu0 0.0
    %130 = vmatmul.mubr.f32.gmra.mrb[0].mxu0 %v41
    %v131 = vpop.f32.mrb[0].mxu0
    %v132 = vadd.f32 %v63, %v131
    %v133 = vpop.f32.mrb[0].mxu0
    %134 = vdwg.mxu0
    %v135 = vtanh.pop %v132
    %136 = vst [vmem:[#allocation7] sm:$0x3] %v135
    // Predicated region
    $region22: #{tpu_custom_call.1} parent=1 // pred_check
      _
    $region23: #{tpu_custom_call.1} parent=1 // pred_check_branch
      %138 = sbr.rel (0) target = $region25
    $region24: #{tpu_custom_call.1} parent=1 // pred_region
      %s140 = ssub.s32 32, 32
      %141 = vsyncadd [#allocation4], %s140
      %s143 = sshll.u32 [#allocation7], 4
      %s144 = int_to_ptr.vmem [resolvable:$true] %s143
      %146 = dma.vmem_to_hbm [thread:$0]  %s144, 32, %s3, [#allocation4]
    $region25: #{tpu_custom_call.1} parent=1 // pred_fallthru
      _
    // Predicated region
    $region26: #{tpu_custom_call.1} parent=1 // pred_check
      _
    $region27: #{tpu_custom_call.1} parent=1 // pred_check_branch
      %148 = sbr.rel (0) target = $region29
    $region28: #{tpu_custom_call.1} parent=1 // pred_region
      %149 = dma.done [#allocation4], 32
    $region29: #{tpu_custom_call.1} parent=1 // pred_fallthru
      _
    %150 = vsyncpa [#allocation3], 1
    %151 = vsyncpa [#allocation6], 1
    %152 = vsyncpa [#allocation4], 1

</llo_original>
